<compile_context>
chip_gen: v7x
topology: tpu7x:2x2x1
jax: 0.10.0
libtpu: 0.0.40
codegen_flags: <defaults>
</compile_context>

<pallas_src>
import jax
import jax.numpy as jnp
import numpy as np
from jax.experimental import pallas as pl
from jax.experimental.pallas import tpu as pltpu


def _round_up(x, m):
    return ((x + m - 1) // m) * m


# ----------------------------------------------------------------------------
# Constant repacking (once, outside jit): each Conv2d(k=4, s=2) becomes one
# banded matrix G_cat[4*K_in, lane_out] (4 kernel-row blocks stacked along K)
# plus a bias row [1, lane_out]; lane_out is padded to a multiple of 128.
# ----------------------------------------------------------------------------
def build_encoder_constants(params, in_hw):
    H, W = in_hw
    h_true, w_true = H, W
    lane_in = W * params[0][0].shape[1]          # channels-last lane width
    consts, geoms = [], []
    for (wt, bs) in params:
        wt = np.asarray(wt, np.float32)          # [OC, C, KH, KW]
        bs = np.asarray(bs, np.float32)          # [OC]
        OC, C, KH, KW = wt.shape
        oh = (h_true - KH) // 2 + 1
        ow = (w_true - KW) // 2 + 1
        lane_out = _round_up(ow * OC, 128)
        G = np.zeros((KH * lane_in, lane_out), np.float32)
        for ki in range(KH):
            for kj in range(KW):
                blk = wt[:, :, ki, kj].T         # [C, OC]
                for o in range(ow):
                    wi = 2 * o + kj              # input column (channels-last)
                    r0 = ki * lane_in + wi * C
                    G[r0:r0 + C, o * OC:(o + 1) * OC] = blk
        brow = np.zeros((1, lane_out), np.float32)
        brow[0, :ow * OC] = np.tile(bs, ow)
        consts.append((jnp.asarray(G), jnp.asarray(brow)))
        geoms.append((oh, ow, OC, lane_out))
        h_true, w_true, lane_in = oh, ow, lane_out
    return consts, tuple(geoms)


# ----------------------------------------------------------------------------
# Fused encoder kernel: one grid step = TB images, 4 conv+ReLU layers, each a
# single deep-K matmul.  refs = (x_cat, [G, bias] * n_layers, out, scratches).
# ----------------------------------------------------------------------------
def _make_encoder_kernel(tb, rows, n_layers, slack=8):
    # rows[l] = per-image sublane rows of layer l's output inside the kernel;
    # rows[0] comes pre-gathered from the wrapper, rows[l] = rows[l-1] // 2.
    def kernel(*refs):
        x_ref = refs[0]
        o_ref = refs[1 + 2 * n_layers]
        scratch = refs[2 + 2 * n_layers:]

        # ---- layer 1: lhs was im2col-row-gathered by the wrapper ----------
        g_ref, b_ref = refs[1], refs[2]
        y = jnp.dot(x_ref[...], g_ref[...], preferred_element_type=jnp.float32)
        y = jnp.maximum(y + b_ref[...], 0.0)

        # ---- layers 2..n: strided row selection + one matmul each ---------
        for l in range(1, n_layers):
            s_prev = scratch[l - 1]
            m_in = tb * rows[l - 1]
            s_prev[0:m_in, :] = y
            # zero the slack rows so the (over-reaching, pad-row-only) strided
            # reads below are deterministic and finite
            s_prev[m_in:m_in + slack, :] = jnp.zeros(
                (slack, y.shape[1]), y.dtype)

            g_ref, b_ref = refs[1 + 2 * l], refs[2 + 2 * l]
            m_out = tb * rows[l]
            # rows 2*oh + ki for all images at once = 4 strided sublane reads,
            # concatenated along lanes -> lhs [m_out, 4*K_in]
            lhs = jnp.concatenate(
                [s_prev[pl.ds(ki, m_out, stride=2), :] for ki in range(4)],
                axis=-1)
            y = jnp.dot(lhs, g_ref[...], preferred_element_type=jnp.float32)
            y = jnp.maximum(y + b_ref[...], 0.0)

        o_ref[...] = y.astype(o_ref.dtype)

    return kernel


def _pick_batch_tile(B, last_rows, cap=16):
    if B <= cap:
        return B                       # single block == full array: always legal
    for tb in range(cap, 0, -1):
        if B % tb == 0 and (tb * last_rows) % 8 == 0:
            return tb
    return B                           # fallback: whole batch in one block


# ----------------------------------------------------------------------------
# Forward pass: one pallas_call for the whole encoder.
# ----------------------------------------------------------------------------
def image_encoder_forward(img, consts, geoms):
    """img: [B, C, H, W] float32 (NCHW).  Returns torch.flatten(enc(img), 1)."""
    B, C, H, W = img.shape
    KH = 4
    n_layers = len(consts)
    OH1 = geoms[0][0]

    # per-image sublane row budget of each in-kernel activation (halving chain)
    rows = [_round_up(OH1, 8)]
    for l in range(1, n_layers):
        r = rows[-1] // 2
        assert r >= geoms[l][0], "row-halving chain must cover true OH"
        rows.append(r)

    TB = _pick_batch_tile(B, rows[-1])
    assert B % TB == 0

    # ---- layer-1 im2col row gather (pure layout plumbing, done in XLA) ----
    x = jnp.transpose(img, (0, 2, 3, 1)).reshape(B, H, W * C)     # [B, H, W*C]
    R1 = rows[0]
    parts = []
    for ki in range(KH):
        xk = jax.lax.slice_in_dim(x, ki, ki + 2 * (OH1 - 1) + 1,
                                  stride=2, axis=1)               # [B, OH1, W*C]
        parts.append(jnp.pad(xk, ((0, 0), (0, R1 - OH1), (0, 0))))
    x_cat = jnp.concatenate(parts, axis=-1).reshape(B * R1, KH * W * C)

    # ---- pallas_call -------------------------------------------------------
    flat_args = [x_cat]
    in_specs = [pl.BlockSpec((TB * R1, KH * W * C), lambda i: (i, 0))]
    for (G, brow) in consts:
        flat_args += [G, brow]
        in_specs += [pl.BlockSpec(G.shape, lambda i: (0, 0)),      # VMEM-resident
                     pl.BlockSpec(brow.shape, lambda i: (0, 0))]   # constants
    # NOTE: pipeline_mode=pl.Buffered(1) on the constant specs would halve
    # their (already tiny, ~0.9 MB) double-buffered footprint; skipped here.

    lane_last = geoms[-1][3]
    out_rows = rows[-1]
    scratch_shapes = [pltpu.VMEM((TB * rows[l] + 8, geoms[l][3]), jnp.float32)
                      for l in range(n_layers - 1)]

    out = pl.pallas_call(
        _make_encoder_kernel(TB, tuple(rows), n_layers),
        out_shape=jax.ShapeDtypeStruct((B * out_rows, lane_last), jnp.float32),
        grid=(B // TB,),
        in_specs=in_specs,
        out_specs=pl.BlockSpec((TB * out_rows, lane_last), lambda i: (i, 0)),
        scratch_shapes=scratch_shapes,
        compiler_params=pltpu.CompilerParams(
            dimension_semantics=("parallel",)),    # v7x: blocks split across TCs
    )(*flat_args)

    # ---- final NCHW c-major flatten (layout plumbing, done in XLA) --------
    OH4, OW4, OC4, _ = geoms[-1]
    y = out.reshape(B, out_rows, lane_last)[:, :OH4, :OW4 * OC4]
    y = y.reshape(B, OH4, OW4, OC4).transpose(0, 3, 1, 2).reshape(B, -1)
    return y


# ----------------------------------------------------------------------------
# Parameter init (PyTorch Conv2d default init) and pure-JAX reference.
# ----------------------------------------------------------------------------
def init_image_encoder_params(key, N):
    channels = [(1, N), (N, 2 * N), (2 * N, 4 * N), (4 * N, 8 * N)]
    params = []
    for (cin, cout) in channels:
        key, kw_, kb_ = jax.random.split(key, 3)
        fan_in = cin * 4 * 4
        bound = 1.0 / float(np.sqrt(fan_in))
        w = jax.random.uniform(kw_, (cout, cin, 4, 4), jnp.float32, -bound, bound)
        b = jax.random.uniform(kb_, (cout,), jnp.float32, -bound, bound)
        params.append((w, b))
    return params


def _reference_forward(img, params):
    x = img
    for (w, b) in params:
        x = jax.lax.conv_general_dilated(
            x, w, window_strides=(2, 2), padding="VALID",
            dimension_numbers=("NCHW", "OIHW", "NCHW"))
        x = jnp.maximum(x + b.reshape(1, -1, 1, 1), 0.0)
    return x.reshape(x.shape[0], -1)


if __name__ == "__main__":
    N = 4                                    # config.image_encoder.N (small)
    B, C, H, W = 2, 1, 64, 64                # grayscale 64x64 input

    key = jax.random.PRNGKey(0)
    k_img, k_params = jax.random.split(key)
    img = jax.random.normal(k_img, (B, C, H, W), dtype=jnp.float32)
    params = init_image_encoder_params(k_params, N)

    consts, geoms = build_encoder_constants(params, (H, W))

    fwd = jax.jit(lambda im, cs: image_encoder_forward(im, cs, geoms))
    out = jax.block_until_ready(fwd(img, consts))

    ref = _reference_forward(img, params)
    assert out.shape == (B, 8 * N * 2 * 2), out.shape            # [2, 128]
    err = float(jnp.max(jnp.abs(out - ref)))
    assert jnp.allclose(out, ref, atol=2e-4, rtol=2e-4), err

    print("KERNEL_OK")
</pallas_src>

<mosaic_0001>
module attributes {stable_mosaic.version = 11 : i64} {
  func.func @kernel(%arg0: i32, %arg1: memref<64x256xf32, #tpu.memory_space<vmem>>, %arg2: memref<256x128xf32, #tpu.memory_space<vmem>>, %arg3: memref<1x128xf32, #tpu.memory_space<vmem>>, %arg4: memref<512x128xf32, #tpu.memory_space<vmem>>, %arg5: memref<1x128xf32, #tpu.memory_space<vmem>>, %arg6: memref<512x128xf32, #tpu.memory_space<vmem>>, %arg7: memref<1x128xf32, #tpu.memory_space<vmem>>, %arg8: memref<512x128xf32, #tpu.memory_space<vmem>>, %arg9: memref<1x128xf32, #tpu.memory_space<vmem>>, %arg10: memref<8x128xf32, #tpu.memory_space<vmem>>, %arg11: memref<72x128xf32, #tpu.memory_space<vmem>>, %arg12: memref<40x128xf32, #tpu.memory_space<vmem>>, %arg13: memref<24x128xf32, #tpu.memory_space<vmem>>) attributes {dimension_semantics = [#tpu.dimension_semantics<parallel>], iteration_bounds = array<i64: 1>, scalar_prefetch = 0 : i64, scratch_operands = 3 : i64, tpu.core_type = #tpu.core_type<tc>, window_params = [{transform_indices = @transform_0, window_bounds = array<i64: 64, 256>}, {pipeline_mode = #tpu.pipeline_mode<synchronous>, transform_indices = @transform_1, window_bounds = array<i64: 256, 128>}, {pipeline_mode = #tpu.pipeline_mode<synchronous>, transform_indices = @transform_2, window_bounds = array<i64: 1, 128>}, {pipeline_mode = #tpu.pipeline_mode<synchronous>, transform_indices = @transform_3, window_bounds = array<i64: 512, 128>}, {pipeline_mode = #tpu.pipeline_mode<synchronous>, transform_indices = @transform_4, window_bounds = array<i64: 1, 128>}, {pipeline_mode = #tpu.pipeline_mode<synchronous>, transform_indices = @transform_5, window_bounds = array<i64: 512, 128>}, {pipeline_mode = #tpu.pipeline_mode<synchronous>, transform_indices = @transform_6, window_bounds = array<i64: 1, 128>}, {pipeline_mode = #tpu.pipeline_mode<synchronous>, transform_indices = @transform_7, window_bounds = array<i64: 512, 128>}, {pipeline_mode = #tpu.pipeline_mode<synchronous>, transform_indices = @transform_8, window_bounds = array<i64: 1, 128>}, {transform_indices = @transform_9, window_bounds = array<i64: 8, 128>}]} {
    %c0 = arith.constant 0 : index
    %c0_0 = arith.constant 0 : index
    %0 = vector.load %arg1[%c0, %c0_0] : memref<64x256xf32, #tpu.memory_space<vmem>>, vector<64x256xf32>
    %c0_1 = arith.constant 0 : index
    %c0_2 = arith.constant 0 : index
    %1 = vector.load %arg2[%c0_1, %c0_2] : memref<256x128xf32, #tpu.memory_space<vmem>>, vector<256x128xf32>
    %cst = arith.constant dense<0.000000e+00> : vector<64x128xf32>
    %2 = tpu.matmul %0, %1, %cst {dimension_numbers = #tpu.dot_dimension_numbers<[1], [0], [0], [1], [0, 0, 1, 1], [], []>} : vector<64x256xf32>, vector<256x128xf32>, vector<64x128xf32> -> vector<64x128xf32>
    %c0_3 = arith.constant 0 : index
    %c0_4 = arith.constant 0 : index
    %3 = vector.load %arg3[%c0_3, %c0_4] : memref<1x128xf32, #tpu.memory_space<vmem>>, vector<1x128xf32>
    %4 = vector.broadcast %3 : vector<1x128xf32> to vector<64x128xf32>
    %5 = arith.addf %2, %4 : vector<64x128xf32>
    %cst_5 = arith.constant 0.000000e+00 : f32
    %6 = vector.broadcast %cst_5 : f32 to vector<64x128xf32>
    %7 = arith.maximumf %5, %6 : vector<64x128xf32>
    %c0_6 = arith.constant 0 : index
    %c0_7 = arith.constant 0 : index
    %8 = vector.load %arg11[%c0_6, %c0_7] : memref<72x128xf32, #tpu.memory_space<vmem>>, vector<64x128xf32>
    tpu.vector_store %arg11[%c0_6, %c0_7], %7 {strides = array<i32>} : memref<72x128xf32, #tpu.memory_space<vmem>>, vector<64x128xf32>,
    %cst_8 = arith.constant 0.000000e+00 : f32
    %9 = vector.broadcast %cst_8 : f32 to vector<8x128xf32>
    %c64 = arith.constant 64 : index
    %c0_9 = arith.constant 0 : index
    %10 = vector.load %arg11[%c64, %c0_9] : memref<72x128xf32, #tpu.memory_space<vmem>>, vector<8x128xf32>
    tpu.vector_store %arg11[%c64, %c0_9], %9 {strides = array<i32>} : memref<72x128xf32, #tpu.memory_space<vmem>>, vector<8x128xf32>,
    %c0_10 = arith.constant 0 : index
    %c0_11 = arith.constant 0 : index
    %11 = tpu.strided_load %arg11[%c0_10, %c0_11] {strides = array<i32: 2, 1>} : memref<72x128xf32, #tpu.memory_space<vmem>>, vector<32x128xf32>
    %c1 = arith.constant 1 : index
    %c0_12 = arith.constant 0 : index
    %12 = tpu.strided_load %arg11[%c1, %c0_12] {strides = array<i32: 2, 1>} : memref<72x128xf32, #tpu.memory_space<vmem>>, vector<32x128xf32>
    %c2 = arith.constant 2 : index
    %c0_13 = arith.constant 0 : index
    %13 = tpu.strided_load %arg11[%c2, %c0_13] {strides = array<i32: 2, 1>} : memref<72x128xf32, #tpu.memory_space<vmem>>, vector<32x128xf32>
    %c3 = arith.constant 3 : index
    %c0_14 = arith.constant 0 : index
    %14 = tpu.strided_load %arg11[%c3, %c0_14] {strides = array<i32: 2, 1>} : memref<72x128xf32, #tpu.memory_space<vmem>>, vector<32x128xf32>
    %15 = tpu.concatenate %11, %12, %13, %14 in 1 : vector<32x128xf32>, vector<32x128xf32>, vector<32x128xf32>, vector<32x128xf32> -> vector<32x512xf32>
    %c0_15 = arith.constant 0 : index
    %c0_16 = arith.constant 0 : index
    %16 = vector.load %arg4[%c0_15, %c0_16] : memref<512x128xf32, #tpu.memory_space<vmem>>, vector<512x128xf32>
    %cst_17 = arith.constant dense<0.000000e+00> : vector<32x128xf32>
    %17 = tpu.matmul %15, %16, %cst_17 {dimension_numbers = #tpu.dot_dimension_numbers<[1], [0], [0], [1], [0, 0, 1, 1], [], []>} : vector<32x512xf32>, vector<512x128xf32>, vector<32x128xf32> -> vector<32x128xf32>
    %c0_18 = arith.constant 0 : index
    %c0_19 = arith.constant 0 : index
    %18 = vector.load %arg5[%c0_18, %c0_19] : memref<1x128xf32, #tpu.memory_space<vmem>>, vector<1x128xf32>
    %19 = vector.broadcast %18 : vector<1x128xf32> to vector<32x128xf32>
    %20 = arith.addf %17, %19 : vector<32x128xf32>
    %cst_20 = arith.constant 0.000000e+00 : f32
    %21 = vector.broadcast %cst_20 : f32 to vector<32x128xf32>
    %22 = arith.maximumf %20, %21 : vector<32x128xf32>
    %c0_21 = arith.constant 0 : index
    %c0_22 = arith.constant 0 : index
    %23 = vector.load %arg12[%c0_21, %c0_22] : memref<40x128xf32, #tpu.memory_space<vmem>>, vector<32x128xf32>
    tpu.vector_store %arg12[%c0_21, %c0_22], %22 {strides = array<i32>} : memref<40x128xf32, #tpu.memory_space<vmem>>, vector<32x128xf32>,
    %cst_23 = arith.constant 0.000000e+00 : f32
    %24 = vector.broadcast %cst_23 : f32 to vector<8x128xf32>
    %c32 = arith.constant 32 : index
    %c0_24 = arith.constant 0 : index
    %25 = vector.load %arg12[%c32, %c0_24] : memref<40x128xf32, #tpu.memory_space<vmem>>, vector<8x128xf32>
    tpu.vector_store %arg12[%c32, %c0_24], %24 {strides = array<i32>} : memref<40x128xf32, #tpu.memory_space<vmem>>, vector<8x128xf32>,
    %c0_25 = arith.constant 0 : index
    %c0_26 = arith.constant 0 : index
    %26 = tpu.strided_load %arg12[%c0_25, %c0_26] {strides = array<i32: 2, 1>} : memref<40x128xf32, #tpu.memory_space<vmem>>, vector<16x128xf32>
    %c1_27 = arith.constant 1 : index
    %c0_28 = arith.constant 0 : index
    %27 = tpu.strided_load %arg12[%c1_27, %c0_28] {strides = array<i32: 2, 1>} : memref<40x128xf32, #tpu.memory_space<vmem>>, vector<16x128xf32>
    %c2_29 = arith.constant 2 : index
    %c0_30 = arith.constant 0 : index
    %28 = tpu.strided_load %arg12[%c2_29, %c0_30] {strides = array<i32: 2, 1>} : memref<40x128xf32, #tpu.memory_space<vmem>>, vector<16x128xf32>
    %c3_31 = arith.constant 3 : index
    %c0_32 = arith.constant 0 : index
    %29 = tpu.strided_load %arg12[%c3_31, %c0_32] {strides = array<i32: 2, 1>} : memref<40x128xf32, #tpu.memory_space<vmem>>, vector<16x128xf32>
    %30 = tpu.concatenate %26, %27, %28, %29 in 1 : vector<16x128xf32>, vector<16x128xf32>, vector<16x128xf32>, vector<16x128xf32> -> vector<16x512xf32>
    %c0_33 = arith.constant 0 : index
    %c0_34 = arith.constant 0 : index
    %31 = vector.load %arg6[%c0_33, %c0_34] : memref<512x128xf32, #tpu.memory_space<vmem>>, vector<512x128xf32>
    %cst_35 = arith.constant dense<0.000000e+00> : vector<16x128xf32>
    %32 = tpu.matmul %30, %31, %cst_35 {dimension_numbers = #tpu.dot_dimension_numbers<[1], [0], [0], [1], [0, 0, 1, 1], [], []>} : vector<16x512xf32>, vector<512x128xf32>, vector<16x128xf32> -> vector<16x128xf32>
    %c0_36 = arith.constant 0 : index
    %c0_37 = arith.constant 0 : index
    %33 = vector.load %arg7[%c0_36, %c0_37] : memref<1x128xf32, #tpu.memory_space<vmem>>, vector<1x128xf32>
    %34 = vector.broadcast %33 : vector<1x128xf32> to vector<16x128xf32>
    %35 = arith.addf %32, %34 : vector<16x128xf32>
    %cst_38 = arith.constant 0.000000e+00 : f32
    %36 = vector.broadcast %cst_38 : f32 to vector<16x128xf32>
    %37 = arith.maximumf %35, %36 : vector<16x128xf32>
    %c0_39 = arith.constant 0 : index
    %c0_40 = arith.constant 0 : index
    %38 = vector.load %arg13[%c0_39, %c0_40] : memref<24x128xf32, #tpu.memory_space<vmem>>, vector<16x128xf32>
    tpu.vector_store %arg13[%c0_39, %c0_40], %37 {strides = array<i32>} : memref<24x128xf32, #tpu.memory_space<vmem>>, vector<16x128xf32>,
    %cst_41 = arith.constant 0.000000e+00 : f32
    %39 = vector.broadcast %cst_41 : f32 to vector<8x128xf32>
    %c16 = arith.constant 16 : index
    %c0_42 = arith.constant 0 : index
    %40 = vector.load %arg13[%c16, %c0_42] : memref<24x128xf32, #tpu.memory_space<vmem>>, vector<8x128xf32>
    tpu.vector_store %arg13[%c16, %c0_42], %39 {strides = array<i32>} : memref<24x128xf32, #tpu.memory_space<vmem>>, vector<8x128xf32>,
    %c0_43 = arith.constant 0 : index
    %c0_44 = arith.constant 0 : index
    %41 = tpu.strided_load %arg13[%c0_43, %c0_44] {strides = array<i32: 2, 1>} : memref<24x128xf32, #tpu.memory_space<vmem>>, vector<8x128xf32>
    %c1_45 = arith.constant 1 : index
    %c0_46 = arith.constant 0 : index
    %42 = tpu.strided_load %arg13[%c1_45, %c0_46] {strides = array<i32: 2, 1>} : memref<24x128xf32, #tpu.memory_space<vmem>>, vector<8x128xf32>
    %c2_47 = arith.constant 2 : index
    %c0_48 = arith.constant 0 : index
    %43 = tpu.strided_load %arg13[%c2_47, %c0_48] {strides = array<i32: 2, 1>} : memref<24x128xf32, #tpu.memory_space<vmem>>, vector<8x128xf32>
    %c3_49 = arith.constant 3 : index
    %c0_50 = arith.constant 0 : index
    %44 = tpu.strided_load %arg13[%c3_49, %c0_50] {strides = array<i32: 2, 1>} : memref<24x128xf32, #tpu.memory_space<vmem>>, vector<8x128xf32>
    %45 = tpu.concatenate %41, %42, %43, %44 in 1 : vector<8x128xf32>, vector<8x128xf32>, vector<8x128xf32>, vector<8x128xf32> -> vector<8x512xf32>
    %c0_51 = arith.constant 0 : index
    %c0_52 = arith.constant 0 : index
    %46 = vector.load %arg8[%c0_51, %c0_52] : memref<512x128xf32, #tpu.memory_space<vmem>>, vector<512x128xf32>
    %cst_53 = arith.constant dense<0.000000e+00> : vector<8x128xf32>
    %47 = tpu.matmul %45, %46, %cst_53 {dimension_numbers = #tpu.dot_dimension_numbers<[1], [0], [0], [1], [0, 0, 1, 1], [], []>} : vector<8x512xf32>, vector<512x128xf32>, vector<8x128xf32> -> vector<8x128xf32>
    %c0_54 = arith.constant 0 : index
    %c0_55 = arith.constant 0 : index
    %48 = vector.load %arg9[%c0_54, %c0_55] : memref<1x128xf32, #tpu.memory_space<vmem>>, vector<1x128xf32>
    %49 = vector.broadcast %48 : vector<1x128xf32> to vector<8x128xf32>
    %50 = arith.addf %47, %49 : vector<8x128xf32>
    %cst_56 = arith.constant 0.000000e+00 : f32
    %51 = vector.broadcast %cst_56 : f32 to vector<8x128xf32>
    %52 = arith.maximumf %50, %51 : vector<8x128xf32>
    %c0_57 = arith.constant 0 : index
    %c0_58 = arith.constant 0 : index
    %53 = vector.load %arg10[%c0_57, %c0_58] : memref<8x128xf32, #tpu.memory_space<vmem>>, vector<8x128xf32>
    tpu.vector_store %arg10[%c0_57, %c0_58], %52 {strides = array<i32>} : memref<8x128xf32, #tpu.memory_space<vmem>>, vector<8x128xf32>,
    return
  }
  func.func @transform_0(%arg0: i32) -> (i32, i32) {
    %c0_i32 = arith.constant 0 : i32
    %c0_i32_0 = arith.constant 0 : i32
    return %arg0, %c0_i32 : i32, i32
  }
  func.func @transform_1(%arg0: i32) -> (i32, i32) {
    %c0_i32 = arith.constant 0 : i32
    %c0_i32_0 = arith.constant 0 : i32
    %c0_i32_1 = arith.constant 0 : i32
    return %c0_i32, %c0_i32_0 : i32, i32
  }
  func.func @transform_2(%arg0: i32) -> (i32, i32) {
    %c0_i32 = arith.constant 0 : i32
    %c0_i32_0 = arith.constant 0 : i32
    %c0_i32_1 = arith.constant 0 : i32
    return %c0_i32, %c0_i32_0 : i32, i32
  }
  func.func @transform_3(%arg0: i32) -> (i32, i32) {
    %c0_i32 = arith.constant 0 : i32
    %c0_i32_0 = arith.constant 0 : i32
    %c0_i32_1 = arith.constant 0 : i32
    return %c0_i32, %c0_i32_0 : i32, i32
  }
  func.func @transform_4(%arg0: i32) -> (i32, i32) {
    %c0_i32 = arith.constant 0 : i32
    %c0_i32_0 = arith.constant 0 : i32
    %c0_i32_1 = arith.constant 0 : i32
    return %c0_i32, %c0_i32_0 : i32, i32
  }
  func.func @transform_5(%arg0: i32) -> (i32, i32) {
    %c0_i32 = arith.constant 0 : i32
    %c0_i32_0 = arith.constant 0 : i32
    %c0_i32_1 = arith.constant 0 : i32
    return %c0_i32, %c0_i32_0 : i32, i32
  }
  func.func @transform_6(%arg0: i32) -> (i32, i32) {
    %c0_i32 = arith.constant 0 : i32
    %c0_i32_0 = arith.constant 0 : i32
    %c0_i32_1 = arith.constant 0 : i32
    return %c0_i32, %c0_i32_0 : i32, i32
  }
  func.func @transform_7(%arg0: i32) -> (i32, i32) {
    %c0_i32 = arith.constant 0 : i32
    %c0_i32_0 = arith.constant 0 : i32
    %c0_i32_1 = arith.constant 0 : i32
    return %c0_i32, %c0_i32_0 : i32, i32
  }
  func.func @transform_8(%arg0: i32) -> (i32, i32) {
    %c0_i32 = arith.constant 0 : i32
    %c0_i32_0 = arith.constant 0 : i32
    %c0_i32_1 = arith.constant 0 : i32
    return %c0_i32, %c0_i32_0 : i32, i32
  }
  func.func @transform_9(%arg0: i32) -> (i32, i32) {
    %c0_i32 = arith.constant 0 : i32
    %c0_i32_0 = arith.constant 0 : i32
    return %arg0, %c0_i32 : i32, i32
  }
}

</mosaic_0001>

<llo_original>
// kernel: _lambda_.1
$region0: #{_lambda_.1}
  #allocation0 [shape = 'u32[]', space=smem, size = 0x4, offset = 0x4, fixed_abs, tag = 'smem constant byte address 0x4 - core index']
  #allocation1 [shape = 'u32[144,128]{1,0:T(1,128)}', space=vmem, size = 0x12000, scoped, tag = 'internal scratch']
  #allocation2 [shape = 'f32[72,128]{1,0:T(8,128)}', space=vmem, size = 0x9000, scoped, tag = 'scratch operand']
  #allocation3 [shape = 'f32[40,128]{1,0:T(8,128)}', space=vmem, size = 0x5000, scoped, tag = 'scratch operand']
  #allocation4 [shape = 'f32[24,128]{1,0:T(8,128)}', space=vmem, size = 0x3000, scoped, tag = 'scratch operand']
  %s0 = inlined_call_operand.vmem [shape: f32[64,256], index: 0, kind: input, shape index: {}]
  %s1 = inlined_call_operand.vmem [shape: f32[256,128], index: 1, kind: input, shape index: {}]
  %s2 = inlined_call_operand.vmem [shape: f32[1,128], index: 2, kind: input, shape index: {}]
  %s3 = inlined_call_operand.vmem [shape: f32[512,128], index: 3, kind: input, shape index: {}]
  %s4 = inlined_call_operand.vmem [shape: f32[1,128], index: 4, kind: input, shape index: {}]
  %s5 = inlined_call_operand.hbm [shape: f32[512,128], index: 5, kind: input, shape index: {}]
  %s6 = inlined_call_operand.vmem [shape: f32[1,128], index: 6, kind: input, shape index: {}]
  %s7 = inlined_call_operand.hbm [shape: f32[512,128], index: 7, kind: input, shape index: {}]
  %s8 = inlined_call_operand.vmem [shape: f32[1,128], index: 8, kind: input, shape index: {}]
  %s9 = inlined_call_operand.vmem [shape: f32[8,128], index: 9, kind: output, shape index: {}]
  %s10 = sld [smem:[#allocation0]]
  $region54: #{_lambda_.1} parent=0
    _
  %s12 = ssub.s32 1, %s10
  %s13 = scalar_select 0, %s12, %s10
  $region1: #{_lambda_.1} parent=0
    #allocation5 [shape = 'u8[262144]{0}', space=vmem, size = 0x40000, scoped, tag = 'input window, operand 5, single buffered']
    #allocation6 [shape = 's32[1]{0}', space=sflag, size = 0x4, scoped, tag = 'scoped memory for _lambda_.1']
    #allocation7 [shape = 'u8[262144]{0}', space=vmem, size = 0x40000, scoped, tag = 'input window, operand 7, single buffered']
    #allocation8 [shape = 's32[1]{0}', space=sflag, size = 0x4, scoped, tag = 'scoped memory for _lambda_.1']
    %14 = vsyncpa [#allocation6], 0
    %15 = vsyncpa [#allocation8], 0
    // Predicated region
    $region2: #{_lambda_.1} parent=1 // pred_check
      _
    $region3: #{_lambda_.1} parent=1 // pred_check_branch
      %17 = sbr.rel (0) target = $region5
    $region4: #{_lambda_.1} parent=1 // pred_region
      _
    $region5: #{_lambda_.1} parent=1 // pred_fallthru
      _
    // Predicated region
    $region6: #{_lambda_.1} parent=1 // pred_check
      _
    $region7: #{_lambda_.1} parent=1 // pred_check_branch
      %19 = sbr.rel (0) target = $region9
    $region8: #{_lambda_.1} parent=1 // pred_region
      _
    $region9: #{_lambda_.1} parent=1 // pred_fallthru
      _
    // Predicated region
    $region10: #{_lambda_.1} parent=1 // pred_check
      _
    $region11: #{_lambda_.1} parent=1 // pred_check_branch
      %21 = sbr.rel (0) target = $region13
    $region12: #{_lambda_.1} parent=1 // pred_region
      _
    $region13: #{_lambda_.1} parent=1 // pred_fallthru
      _
    // Predicated region
    $region14: #{_lambda_.1} parent=1 // pred_check
      _
    $region15: #{_lambda_.1} parent=1 // pred_check_branch
      %23 = sbr.rel (0) target = $region17
    $region16: #{_lambda_.1} parent=1 // pred_region
      _
    $region17: #{_lambda_.1} parent=1 // pred_fallthru
      _
    // Predicated region
    $region18: #{_lambda_.1} parent=1 // pred_check
      _
    $region19: #{_lambda_.1} parent=1 // pred_check_branch
      %25 = sbr.rel (0) target = $region21
    $region20: #{_lambda_.1} parent=1 // pred_region
      _
    $region21: #{_lambda_.1} parent=1 // pred_fallthru
      _
    // Predicated region
    $region22: #{_lambda_.1} parent=1 // pred_check
      _
    $region23: #{_lambda_.1} parent=1 // pred_check_branch
      %27 = sbr.rel (0) target = $region25
    $region24: #{_lambda_.1} parent=1 // pred_region
      %s29 = ssub.s32 8192, 8192
      %30 = vsyncadd [#allocation6], %s29
      %s31 = sshll.u32 [#allocation5], 4
      %s32 = int_to_ptr.vmem [resolvable:$true] %s31
      %37 = dma.hbm_to_vmem [thread:$0]  %s5, 8192, %s32, [#allocation6], 128, 128, 8
    $region25: #{_lambda_.1} parent=1 // pred_fallthru
      _
    // Predicated region
    $region26: #{_lambda_.1} parent=1 // pred_check
      _
    $region27: #{_lambda_.1} parent=1 // pred_check_branch
      %39 = sbr.rel (0) target = $region29
    $region28: #{_lambda_.1} parent=1 // pred_region
      _
    $region29: #{_lambda_.1} parent=1 // pred_fallthru
      _
    // Predicated region
    $region30: #{_lambda_.1} parent=1 // pred_check
      _
    $region31: #{_lambda_.1} parent=1 // pred_check_branch
      %41 = sbr.rel (0) target = $region33
    $region32: #{_lambda_.1} parent=1 // pred_region
      %s43 = ssub.s32 8192, 8192
      %44 = vsyncadd [#allocation8], %s43
      %s45 = sshll.u32 [#allocation7], 4
      %s46 = int_to_ptr.vmem [resolvable:$true] %s45
      %51 = dma.hbm_to_vmem [thread:$0]  %s7, 8192, %s46, [#allocation8], 128, 128, 8
    $region33: #{_lambda_.1} parent=1 // pred_fallthru
      _
    // Predicated region
    $region34: #{_lambda_.1} parent=1 // pred_check
      _
    $region35: #{_lambda_.1} parent=1 // pred_check_branch
      %53 = sbr.rel (0) target = $region37
    $region36: #{_lambda_.1} parent=1 // pred_region
      _
    $region37: #{_lambda_.1} parent=1 // pred_fallthru
      _
    // Predicated region
    $region38: #{_lambda_.1} parent=1 // pred_check
      _
    $region39: #{_lambda_.1} parent=1 // pred_check_branch
      %55 = sbr.rel (0) target = $region41
    $region40: #{_lambda_.1} parent=1 // pred_region
      %56 = dma.done [#allocation6], 8192
    $region41: #{_lambda_.1} parent=1 // pred_fallthru
      _
    // Predicated region
    $region42: #{_lambda_.1} parent=1 // pred_check
      _
    $region43: #{_lambda_.1} parent=1 // pred_check_branch
      %58 = sbr.rel (0) target = $region45
    $region44: #{_lambda_.1} parent=1 // pred_region
      %59 = dma.done [#allocation8], 8192
    $region45: #{_lambda_.1} parent=1 // pred_fallthru
      _
    %v60 = vld [vmem:[%s0] sm:$0xff]
    %v61 = vld [vmem:[%s0 + $0x8] sm:$0xff]
    %v62 = vld [vmem:[%s0 + $0x10] sm:$0xff]
    %v63 = vld [vmem:[%s0 + $0x18] sm:$0xff]
    %v64 = vld [vmem:[%s0 + $0x20] sm:$0xff]
    %v65 = vld [vmem:[%s0 + $0x28] sm:$0xff]
    %v66 = vld [vmem:[%s0 + $0x30] sm:$0xff]
    %v67 = vld [vmem:[%s0 + $0x38] sm:$0xff]
    %v68 = vld [vmem:[%s0 + $0x40] sm:$0xff]
    %v69 = vld [vmem:[%s0 + $0x48] sm:$0xff]
    %v70 = vld [vmem:[%s0 + $0x50] sm:$0xff]
    %v71 = vld [vmem:[%s0 + $0x58] sm:$0xff]
    %v72 = vld [vmem:[%s0 + $0x60] sm:$0xff]
    %v73 = vld [vmem:[%s0 + $0x68] sm:$0xff]
    %v74 = vld [vmem:[%s0 + $0x70] sm:$0xff]
    %v75 = vld [vmem:[%s0 + $0x78] sm:$0xff]
    %v76 = vld [vmem:[%s1] sm:$0xff]
    %v77 = vld [vmem:[%s1 + $0x8] sm:$0xff]
    %v78 = vld [vmem:[%s1 + $0x10] sm:$0xff]
    %v79 = vld [vmem:[%s1 + $0x18] sm:$0xff]
    %v80 = vld [vmem:[%s1 + $0x20] sm:$0xff]
    %v81 = vld [vmem:[%s1 + $0x28] sm:$0xff]
    %v82 = vld [vmem:[%s1 + $0x30] sm:$0xff]
    %v83 = vld [vmem:[%s1 + $0x38] sm:$0xff]
    %v84 = vld [vmem:[%s1 + $0x40] sm:$0xff]
    %v85 = vld [vmem:[%s1 + $0x48] sm:$0xff]
    %v86 = vld [vmem:[%s1 + $0x50] sm:$0xff]
    %v87 = vld [vmem:[%s1 + $0x58] sm:$0xff]
    %v88 = vld [vmem:[%s1 + $0x60] sm:$0xff]
    %v89 = vld [vmem:[%s1 + $0x68] sm:$0xff]
    %v90 = vld [vmem:[%s1 + $0x70] sm:$0xff]
    %v91 = vld [vmem:[%s1 + $0x78] sm:$0xff]
    %v92 = vld [vmem:[%s1 + $0x80] sm:$0xff]
    %v93 = vld [vmem:[%s1 + $0x88] sm:$0xff]
    %v94 = vld [vmem:[%s1 + $0x90] sm:$0xff]
    %v95 = vld [vmem:[%s1 + $0x98] sm:$0xff]
    %v96 = vld [vmem:[%s1 + $0xa0] sm:$0xff]
    %v97 = vld [vmem:[%s1 + $0xa8] sm:$0xff]
    %v98 = vld [vmem:[%s1 + $0xb0] sm:$0xff]
    %v99 = vld [vmem:[%s1 + $0xb8] sm:$0xff]
    %v100 = vld [vmem:[%s1 + $0xc0] sm:$0xff]
    %v101 = vld [vmem:[%s1 + $0xc8] sm:$0xff]
    %v102 = vld [vmem:[%s1 + $0xd0] sm:$0xff]
    %v103 = vld [vmem:[%s1 + $0xd8] sm:$0xff]
    %v104 = vld [vmem:[%s1 + $0xe0] sm:$0xff]
    %v105 = vld [vmem:[%s1 + $0xe8] sm:$0xff]
    %v106 = vld [vmem:[%s1 + $0xf0] sm:$0xff]
    %v107 = vld [vmem:[%s1 + $0xf8] sm:$0xff]
    %v108 = vld [vmem:[%s2] sm:$0x1]
    %v110 = vlaneseq
    %v111 = vshrl.u32 %v110, 7
    %v112 = vsub.s32 0, %v111
    %v113 = vrot.slane %v108, %v112
    %115 = vmatprep.subr.mxu0 0.0
    %116 = vmatpush1.msra.mxu0 %v76
    %117 = vmatprep.subr.mxu0 0.0
    %118 = vmatpush1.msra.mxu0 %v77
    %119 = vmatprep.subr.mxu0 0.0
    %120 = vmatpush1.msra.mxu0 %v78
    %121 = vmatprep.subr.mxu0 0.0
    %122 = vmatpush1.msra.mxu0 %v79
    %123 = vmatprep.subr.mxu0 0.0
    %124 = vmatpush1.msra.mxu0 %v80
    %125 = vmatprep.subr.mxu0 0.0
    %126 = vmatpush1.msra.mxu0 %v81
    %127 = vmatprep.subr.mxu0 0.0
    %128 = vmatpush1.msra.mxu0 %v82
    %129 = vmatprep.subr.mxu0 0.0
    %130 = vmatpush1.msra.mxu0 %v83
    %131 = vmatprep.subr.mxu0 0.0
    %132 = vmatpush1.msra.mxu0 %v84
    %133 = vmatprep.subr.mxu0 0.0
    %134 = vmatpush1.msra.mxu0 %v85
    %135 = vmatprep.subr.mxu0 0.0
    %136 = vmatpush1.msra.mxu0 %v86
    %137 = vmatprep.subr.mxu0 0.0
    %138 = vmatpush1.msra.mxu0 %v87
    %139 = vmatprep.subr.mxu0 0.0
    %140 = vmatpush1.msra.mxu0 %v88
    %141 = vmatprep.subr.mxu0 0.0
    %142 = vmatpush1.msra.mxu0 %v89
    %143 = vmatprep.subr.mxu0 0.0
    %144 = vmatpush1.msra.mxu0 %v90
    %145 = vmatprep.subr.mxu0 0.0
    %146 = vmatpush1.msra.mxu0 %v91
    %147 = vmatprep.subr.mxu0 0.0
    %148 = vmatpush1.msra.mxu0 %v92
    %149 = vmatprep.subr.mxu0 0.0
    %150 = vmatpush1.msra.mxu0 %v93
    %151 = vmatprep.subr.mxu0 0.0
    %152 = vmatpush1.msra.mxu0 %v94
    %153 = vmatprep.subr.mxu0 0.0
    %154 = vmatpush1.msra.mxu0 %v95
    %155 = vmatprep.subr.mxu0 0.0
    %156 = vmatpush1.msra.mxu0 %v96
    %157 = vmatprep.subr.mxu0 0.0
    %158 = vmatpush1.msra.mxu0 %v97
    %159 = vmatprep.subr.mxu0 0.0
    %160 = vmatpush1.msra.mxu0 %v98
    %161 = vmatprep.subr.mxu0 0.0
    %162 = vmatpush1.msra.mxu0 %v99
    %163 = vmatprep.subr.mxu0 0.0
    %164 = vmatpush1.msra.mxu0 %v100
    %165 = vmatprep.subr.mxu0 0.0
    %166 = vmatpush1.msra.mxu0 %v101
    %167 = vmatprep.subr.mxu0 0.0
    %168 = vmatpush1.msra.mxu0 %v102
    %169 = vmatprep.subr.mxu0 0.0
    %170 = vmatpush1.msra.mxu0 %v103
    %171 = vmatprep.subr.mxu0 0.0
    %172 = vmatpush1.msra.mxu0 %v104
    %173 = vmatprep.subr.mxu0 0.0
    %174 = vmatpush1.msra.mxu0 %v105
    %175 = vmatprep.subr.mxu0 0.0
    %176 = vmatpush1.msra.mxu0 %v106
    %177 = vmatprep.subr.mxu0 0.0
    %178 = vmatpush1.msra.mxu0 %v107
    %179 = vmatprep.mubr.f32.mxu0 %v61
    %180 = vmatmul.mubr.f32.gmra.mrb[0].mxu0 %v60
    %v181 = vpop.f32.mrb[0].mxu0
    %v182 = vadd.f32 %v113, %v181
    %v183 = vpop.f32.mrb[0].mxu0
    %184 = vmatprep.mubr.f32.mxu0 %v63
    %185 = vmatmul.mubr.f32.gmra.mrb[0].mxu0 %v62
    %v186 = vpop.f32.mrb[0].mxu0
    %v187 = vadd.f32 %v113, %v186
    %v188 = vpop.f32.mrb[0].mxu0
    %189 = vmatprep.mubr.f32.mxu0 %v65
    %190 = vmatmul.mubr.f32.gmra.mrb[0].mxu0 %v64
    %v191 = vpop.f32.mrb[0].mxu0
    %v192 = vadd.f32 %v113, %v191
    %v193 = vpop.f32.mrb[0].mxu0
    %194 = vmatprep.mubr.f32.mxu0 %v67
    %195 = vmatmul.mubr.f32.gmra.mrb[0].mxu0 %v66
    %v196 = vpop.f32.mrb[0].mxu0
    %v197 = vadd.f32 %v113, %v196
    %v198 = vpop.f32.mrb[0].mxu0
    %199 = vmatprep.mubr.f32.mxu0 %v69
    %200 = vmatmul.mubr.f32.gmra.mrb[0].mxu0 %v68
    %v201 = vpop.f32.mrb[0].mxu0
    %v202 = vadd.f32 %v113, %v201
    %v203 = vpop.f32.mrb[0].mxu0
    %204 = vmatprep.mubr.f32.mxu0 %v71
    %205 = vmatmul.mubr.f32.gmra.mrb[0].mxu0 %v70
    %v206 = vpop.f32.mrb[0].mxu0
    %v207 = vadd.f32 %v113, %v206
    %v208 = vpop.f32.mrb[0].mxu0
    %209 = vmatprep.mubr.f32.mxu0 %v73
    %210 = vmatmul.mubr.f32.gmra.mrb[0].mxu0 %v72
    %v211 = vpop.f32.mrb[0].mxu0
    %v212 = vadd.f32 %v113, %v211
    %v213 = vpop.f32.mrb[0].mxu0
    %214 = vmatprep.mubr.f32.mxu0 %v75
    %215 = vmatmul.mubr.f32.gmra.mrb[0].mxu0 %v74
    %v216 = vpop.f32.mrb[0].mxu0
    %v217 = vadd.f32 %v113, %v216
    %v218 = vpop.f32.mrb[0].mxu0
    %219 = vdwg.mxu0
    %v220 = vmax.f32 %v182, 0.0
    %v221 = vmax.f32 %v187, 0.0
    %v222 = vmax.f32 %v192, 0.0
    %v223 = vmax.f32 %v197, 0.0
    %v224 = vmax.f32 %v202, 0.0
    %v225 = vmax.f32 %v207, 0.0
    %v226 = vmax.f32 %v212, 0.0
    %v227 = vmax.f32 %v217, 0.0
    %228 = vst [vmem:[#allocation2] sm:$0xff] %v220
    %229 = vst [vmem:[#allocation2 + $0x8] sm:$0xff] %v221
    %230 = vst [vmem:[#allocation2 + $0x10] sm:$0xff] %v222
    %231 = vst [vmem:[#allocation2 + $0x18] sm:$0xff] %v223
    %232 = vst [vmem:[#allocation2 + $0x20] sm:$0xff] %v224
    %233 = vst [vmem:[#allocation2 + $0x28] sm:$0xff] %v225
    %234 = vst [vmem:[#allocation2 + $0x30] sm:$0xff] %v226
    %235 = vst [vmem:[#allocation2 + $0x38] sm:$0xff] %v227
    %236 = vst [vmem:[#allocation2 + $0x40] sm:$0xff] 0.0
    %v237 = vld [vmem:[#allocation2] ss:$2 sm:$0xff]
    %s238 = scalar_lea.vmem [#allocation2], 16
    %v239 = vld [vmem:[%s238] ss:$2 sm:$0xff]
    %s240 = scalar_lea.vmem [#allocation2], 32
    %v241 = vld [vmem:[%s240] ss:$2 sm:$0xff]
    %s242 = scalar_lea.vmem [#allocation2], 48
    %v243 = vld [vmem:[%s242] ss:$2 sm:$0xff]
    %s244 = scalar_lea.vmem [#allocation2], 1
    %v245 = vld [vmem:[%s244] ss:$2 sm:$0xff]
    %s246 = scalar_lea.vmem [#allocation2], 17
    %v247 = vld [vmem:[%s246] ss:$2 sm:$0xff]
    %s248 = scalar_lea.vmem [#allocation2], 33
    %v249 = vld [vmem:[%s248] ss:$2 sm:$0xff]
    %s250 = scalar_lea.vmem [#allocation2], 49
    %v251 = vld [vmem:[%s250] ss:$2 sm:$0xff]
    %s252 = scalar_lea.vmem [#allocation2], 2
    %v253 = vld [vmem:[%s252] ss:$2 sm:$0xff]
    %s254 = scalar_lea.vmem [#allocation2], 18
    %v255 = vld [vmem:[%s254] ss:$2 sm:$0xff]
    %s256 = scalar_lea.vmem [#allocation2], 34
    %v257 = vld [vmem:[%s256] ss:$2 sm:$0xff]
    %s258 = scalar_lea.vmem [#allocation2], 50
    %v259 = vld [vmem:[%s258] ss:$2 sm:$0xff]
    %s260 = scalar_lea.vmem [#allocation2], 3
    %v261 = vld [vmem:[%s260] ss:$2 sm:$0xff]
    %s262 = scalar_lea.vmem [#allocation2], 19
    %v263 = vld [vmem:[%s262] ss:$2 sm:$0xff]
    %s264 = scalar_lea.vmem [#allocation2], 35
    %v265 = vld [vmem:[%s264] ss:$2 sm:$0xff]
    %s266 = scalar_lea.vmem [#allocation2], 51
    %v267 = vld [vmem:[%s266] ss:$2 sm:$0xff]
    %v268 = vld [vmem:[%s3] sm:$0xff]
    %v269 = vld [vmem:[%s3 + $0x8] sm:$0xff]
    %v270 = vld [vmem:[%s3 + $0x10] sm:$0xff]
    %v271 = vld [vmem:[%s3 + $0x18] sm:$0xff]
    %v272 = vld [vmem:[%s3 + $0x20] sm:$0xff]
    %v273 = vld [vmem:[%s3 + $0x28] sm:$0xff]
    %v274 = vld [vmem:[%s3 + $0x30] sm:$0xff]
    %v275 = vld [vmem:[%s3 + $0x38] sm:$0xff]
    %v276 = vld [vmem:[%s3 + $0x40] sm:$0xff]
    %v277 = vld [vmem:[%s3 + $0x48] sm:$0xff]
    %v278 = vld [vmem:[%s3 + $0x50] sm:$0xff]
    %v279 = vld [vmem:[%s3 + $0x58] sm:$0xff]
    %v280 = vld [vmem:[%s3 + $0x60] sm:$0xff]
    %v281 = vld [vmem:[%s3 + $0x68] sm:$0xff]
    %v282 = vld [vmem:[%s3 + $0x70] sm:$0xff]
    %v283 = vld [vmem:[%s3 + $0x78] sm:$0xff]
    %v284 = vld [vmem:[%s3 + $0x80] sm:$0xff]
    %v285 = vld [vmem:[%s3 + $0x88] sm:$0xff]
    %v286 = vld [vmem:[%s3 + $0x90] sm:$0xff]
    %v287 = vld [vmem:[%s3 + $0x98] sm:$0xff]
    %v288 = vld [vmem:[%s3 + $0xa0] sm:$0xff]
    %v289 = vld [vmem:[%s3 + $0xa8] sm:$0xff]
    %v290 = vld [vmem:[%s3 + $0xb0] sm:$0xff]
    %v291 = vld [vmem:[%s3 + $0xb8] sm:$0xff]
    %v292 = vld [vmem:[%s3 + $0xc0] sm:$0xff]
    %v293 = vld [vmem:[%s3 + $0xc8] sm:$0xff]
    %v294 = vld [vmem:[%s3 + $0xd0] sm:$0xff]
    %v295 = vld [vmem:[%s3 + $0xd8] sm:$0xff]
    %v296 = vld [vmem:[%s3 + $0xe0] sm:$0xff]
    %v297 = vld [vmem:[%s3 + $0xe8] sm:$0xff]
    %v298 = vld [vmem:[%s3 + $0xf0] sm:$0xff]
    %v299 = vld [vmem:[%s3 + $0xf8] sm:$0xff]
    %v300 = vld [vmem:[%s3 + $0x100] sm:$0xff]
    %v301 = vld [vmem:[%s3 + $0x108] sm:$0xff]
    %v302 = vld [vmem:[%s3 + $0x110] sm:$0xff]
    %v303 = vld [vmem:[%s3 + $0x118] sm:$0xff]
    %v304 = vld [vmem:[%s3 + $0x120] sm:$0xff]
    %v305 = vld [vmem:[%s3 + $0x128] sm:$0xff]
    %v306 = vld [vmem:[%s3 + $0x130] sm:$0xff]
    %v307 = vld [vmem:[%s3 + $0x138] sm:$0xff]
    %v308 = vld [vmem:[%s3 + $0x140] sm:$0xff]
    %v309 = vld [vmem:[%s3 + $0x148] sm:$0xff]
    %v310 = vld [vmem:[%s3 + $0x150] sm:$0xff]
    %v311 = vld [vmem:[%s3 + $0x158] sm:$0xff]
    %v312 = vld [vmem:[%s3 + $0x160] sm:$0xff]
    %v313 = vld [vmem:[%s3 + $0x168] sm:$0xff]
    %v314 = vld [vmem:[%s3 + $0x170] sm:$0xff]
    %v315 = vld [vmem:[%s3 + $0x178] sm:$0xff]
    %v316 = vld [vmem:[%s3 + $0x180] sm:$0xff]
    %v317 = vld [vmem:[%s3 + $0x188] sm:$0xff]
    %v318 = vld [vmem:[%s3 + $0x190] sm:$0xff]
    %v319 = vld [vmem:[%s3 + $0x198] sm:$0xff]
    %v320 = vld [vmem:[%s3 + $0x1a0] sm:$0xff]
    %v321 = vld [vmem:[%s3 + $0x1a8] sm:$0xff]
    %v322 = vld [vmem:[%s3 + $0x1b0] sm:$0xff]
    %v323 = vld [vmem:[%s3 + $0x1b8] sm:$0xff]
    %v324 = vld [vmem:[%s3 + $0x1c0] sm:$0xff]
    %v325 = vld [vmem:[%s3 + $0x1c8] sm:$0xff]
    %v326 = vld [vmem:[%s3 + $0x1d0] sm:$0xff]
    %v327 = vld [vmem:[%s3 + $0x1d8] sm:$0xff]
    %v328 = vld [vmem:[%s3 + $0x1e0] sm:$0xff]
    %v329 = vld [vmem:[%s3 + $0x1e8] sm:$0xff]
    %v330 = vld [vmem:[%s3 + $0x1f0] sm:$0xff]
    %v331 = vld [vmem:[%s3 + $0x1f8] sm:$0xff]
    %v332 = vld [vmem:[%s4] sm:$0x1]
    %v334 = vlaneseq
    %v335 = vshrl.u32 %v334, 7
    %v336 = vsub.s32 0, %v335
    %v337 = vrot.slane %v332, %v336
    %339 = vmatprep.subr.mxu0 0.0
    %340 = vmatpush1.msra.mxu0 %v268
    %341 = vmatprep.subr.mxu0 0.0
    %342 = vmatpush1.msra.mxu0 %v269
    %343 = vmatprep.subr.mxu0 0.0
    %344 = vmatpush1.msra.mxu0 %v270
    %345 = vmatprep.subr.mxu0 0.0
    %346 = vmatpush1.msra.mxu0 %v271
    %347 = vmatprep.subr.mxu0 0.0
    %348 = vmatpush1.msra.mxu0 %v272
    %349 = vmatprep.subr.mxu0 0.0
    %350 = vmatpush1.msra.mxu0 %v273
    %351 = vmatprep.subr.mxu0 0.0
    %352 = vmatpush1.msra.mxu0 %v274
    %353 = vmatprep.subr.mxu0 0.0
    %354 = vmatpush1.msra.mxu0 %v275
    %355 = vmatprep.subr.mxu0 0.0
    %356 = vmatpush1.msra.mxu0 %v276
    %357 = vmatprep.subr.mxu0 0.0
    %358 = vmatpush1.msra.mxu0 %v277
    %359 = vmatprep.subr.mxu0 0.0
    %360 = vmatpush1.msra.mxu0 %v278
    %361 = vmatprep.subr.mxu0 0.0
    %362 = vmatpush1.msra.mxu0 %v279
    %363 = vmatprep.subr.mxu0 0.0
    %364 = vmatpush1.msra.mxu0 %v280
    %365 = vmatprep.subr.mxu0 0.0
    %366 = vmatpush1.msra.mxu0 %v281
    %367 = vmatprep.subr.mxu0 0.0
    %368 = vmatpush1.msra.mxu0 %v282
    %369 = vmatprep.subr.mxu0 0.0
    %370 = vmatpush1.msra.mxu0 %v283
    %371 = vmatprep.subr.mxu0 0.0
    %372 = vmatpush1.msra.mxu0 %v284
    %373 = vmatprep.subr.mxu0 0.0
    %374 = vmatpush1.msra.mxu0 %v285
    %375 = vmatprep.subr.mxu0 0.0
    %376 = vmatpush1.msra.mxu0 %v286
    %377 = vmatprep.subr.mxu0 0.0
    %378 = vmatpush1.msra.mxu0 %v287
    %379 = vmatprep.subr.mxu0 0.0
    %380 = vmatpush1.msra.mxu0 %v288
    %381 = vmatprep.subr.mxu0 0.0
    %382 = vmatpush1.msra.mxu0 %v289
    %383 = vmatprep.subr.mxu0 0.0
    %384 = vmatpush1.msra.mxu0 %v290
    %385 = vmatprep.subr.mxu0 0.0
    %386 = vmatpush1.msra.mxu0 %v291
    %387 = vmatprep.subr.mxu0 0.0
    %388 = vmatpush1.msra.mxu0 %v292
    %389 = vmatprep.subr.mxu0 0.0
    %390 = vmatpush1.msra.mxu0 %v293
    %391 = vmatprep.subr.mxu0 0.0
    %392 = vmatpush1.msra.mxu0 %v294
    %393 = vmatprep.subr.mxu0 0.0
    %394 = vmatpush1.msra.mxu0 %v295
    %395 = vmatprep.subr.mxu0 0.0
    %396 = vmatpush1.msra.mxu0 %v296
    %397 = vmatprep.subr.mxu0 0.0
    %398 = vmatpush1.msra.mxu0 %v297
    %399 = vmatprep.subr.mxu0 0.0
    %400 = vmatpush1.msra.mxu0 %v298
    %401 = vmatprep.subr.mxu0 0.0
    %402 = vmatpush1.msra.mxu0 %v299
    %403 = vmatprep.mubr.f32.mxu0 %v245
    %404 = vmatmul.mubr.f32.gmra.mrb[0].mxu0 %v237
    %v405 = vpop.f32.mrb[0].mxu0
    %v406 = vadd.f32 %v337, %v405
    %v407 = vpop.f32.mrb[0].mxu0
    %408 = vmatprep.mubr.f32.mxu0 %v247
    %409 = vmatmul.mubr.f32.gmra.mrb[0].mxu0 %v239
    %v410 = vpop.f32.mrb[0].mxu0
    %v411 = vadd.f32 %v337, %v410
    %v412 = vpop.f32.mrb[0].mxu0
    %413 = vmatprep.mubr.f32.mxu0 %v249
    %414 = vmatmul.mubr.f32.gmra.mrb[0].mxu0 %v241
    %v415 = vpop.f32.mrb[0].mxu0
    %v416 = vadd.f32 %v337, %v415
    %v417 = vpop.f32.mrb[0].mxu0
    %418 = vmatprep.mubr.f32.mxu0 %v251
    %419 = vmatmul.mubr.f32.gmra.mrb[0].mxu0 %v243
    %v420 = vpop.f32.mrb[0].mxu0
    %v421 = vadd.f32 %v337, %v420
    %v422 = vpop.f32.mrb[0].mxu0
    %423 = vdwg.mxu0
    %424 = vmatprep.subr.mxu0 0.0
    %425 = vmatpush1.msra.mxu0 %v300
    %426 = vmatprep.subr.mxu0 0.0
    %427 = vmatpush1.msra.mxu0 %v301
    %428 = vmatprep.subr.mxu0 0.0
    %429 = vmatpush1.msra.mxu0 %v302
    %430 = vmatprep.subr.mxu0 0.0
    %431 = vmatpush1.msra.mxu0 %v303
    %432 = vmatprep.subr.mxu0 0.0
    %433 = vmatpush1.msra.mxu0 %v304
    %434 = vmatprep.subr.mxu0 0.0
    %435 = vmatpush1.msra.mxu0 %v305
    %436 = vmatprep.subr.mxu0 0.0
    %437 = vmatpush1.msra.mxu0 %v306
    %438 = vmatprep.subr.mxu0 0.0
    %439 = vmatpush1.msra.mxu0 %v307
    %440 = vmatprep.subr.mxu0 0.0
    %441 = vmatpush1.msra.mxu0 %v308
    %442 = vmatprep.subr.mxu0 0.0
    %443 = vmatpush1.msra.mxu0 %v309
    %444 = vmatprep.subr.mxu0 0.0
    %445 = vmatpush1.msra.mxu0 %v310
    %446 = vmatprep.subr.mxu0 0.0
    %447 = vmatpush1.msra.mxu0 %v311
    %448 = vmatprep.subr.mxu0 0.0
    %449 = vmatpush1.msra.mxu0 %v312
    %450 = vmatprep.subr.mxu0 0.0
    %451 = vmatpush1.msra.mxu0 %v313
    %452 = vmatprep.subr.mxu0 0.0
    %453 = vmatpush1.msra.mxu0 %v314
    %454 = vmatprep.subr.mxu0 0.0
    %455 = vmatpush1.msra.mxu0 %v315
    %456 = vmatprep.subr.mxu0 0.0
    %457 = vmatpush1.msra.mxu0 %v316
    %458 = vmatprep.subr.mxu0 0.0
    %459 = vmatpush1.msra.mxu0 %v317
    %460 = vmatprep.subr.mxu0 0.0
    %461 = vmatpush1.msra.mxu0 %v318
    %462 = vmatprep.subr.mxu0 0.0
    %463 = vmatpush1.msra.mxu0 %v319
    %464 = vmatprep.subr.mxu0 0.0
    %465 = vmatpush1.msra.mxu0 %v320
    %466 = vmatprep.subr.mxu0 0.0
    %467 = vmatpush1.msra.mxu0 %v321
    %468 = vmatprep.subr.mxu0 0.0
    %469 = vmatpush1.msra.mxu0 %v322
    %470 = vmatprep.subr.mxu0 0.0
    %471 = vmatpush1.msra.mxu0 %v323
    %472 = vmatprep.subr.mxu0 0.0
    %473 = vmatpush1.msra.mxu0 %v324
    %474 = vmatprep.subr.mxu0 0.0
    %475 = vmatpush1.msra.mxu0 %v325
    %476 = vmatprep.subr.mxu0 0.0
    %477 = vmatpush1.msra.mxu0 %v326
    %478 = vmatprep.subr.mxu0 0.0
    %479 = vmatpush1.msra.mxu0 %v327
    %480 = vmatprep.subr.mxu0 0.0
    %481 = vmatpush1.msra.mxu0 %v328
    %482 = vmatprep.subr.mxu0 0.0
    %483 = vmatpush1.msra.mxu0 %v329
    %484 = vmatprep.subr.mxu0 0.0
    %485 = vmatpush1.msra.mxu0 %v330
    %486 = vmatprep.subr.mxu0 0.0
    %487 = vmatpush1.msra.mxu0 %v331
    %488 = vmatprep.mubr.f32.mxu0 %v261
    %489 = vmatmul.mubr.f32.gmra.mrb[0].mxu0 %v253
    %v490 = vpop.f32.mrb[0].mxu0
    %v491 = vadd.f32 %v406, %v490
    %v492 = vpop.f32.mrb[0].mxu0
    %493 = vmatprep.mubr.f32.mxu0 %v263
    %494 = vmatmul.mubr.f32.gmra.mrb[0].mxu0 %v255
    %v495 = vpop.f32.mrb[0].mxu0
    %v496 = vadd.f32 %v411, %v495
    %v497 = vpop.f32.mrb[0].mxu0
    %498 = vmatprep.mubr.f32.mxu0 %v265
    %499 = vmatmul.mubr.f32.gmra.mrb[0].mxu0 %v257
    %v500 = vpop.f32.mrb[0].mxu0
    %v501 = vadd.f32 %v416, %v500
    %v502 = vpop.f32.mrb[0].mxu0
    %503 = vmatprep.mubr.f32.mxu0 %v267
    %504 = vmatmul.mubr.f32.gmra.mrb[0].mxu0 %v259
    %v505 = vpop.f32.mrb[0].mxu0
    %v506 = vadd.f32 %v421, %v505
    %v507 = vpop.f32.mrb[0].mxu0
    %508 = vdwg.mxu0
    %v509 = vmax.f32 %v491, 0.0
    %v510 = vmax.f32 %v496, 0.0
    %v511 = vmax.f32 %v501, 0.0
    %v512 = vmax.f32 %v506, 0.0
    %513 = vst [vmem:[#allocation3] sm:$0xff] %v509
    %514 = vst [vmem:[#allocation3 + $0x8] sm:$0xff] %v510
    %515 = vst [vmem:[#allocation3 + $0x10] sm:$0xff] %v511
    %516 = vst [vmem:[#allocation3 + $0x18] sm:$0xff] %v512
    %517 = vst [vmem:[#allocation3 + $0x20] sm:$0xff] 0.0
    %v518 = vld [vmem:[#allocation3] ss:$2 sm:$0xff]
    %s519 = scalar_lea.vmem [#allocation3], 16
    %v520 = vld [vmem:[%s519] ss:$2 sm:$0xff]
    %s521 = scalar_lea.vmem [#allocation3], 1
    %v522 = vld [vmem:[%s521] ss:$2 sm:$0xff]
    %s523 = scalar_lea.vmem [#allocation3], 17
    %v524 = vld [vmem:[%s523] ss:$2 sm:$0xff]
    %s525 = scalar_lea.vmem [#allocation3], 2
    %v526 = vld [vmem:[%s525] ss:$2 sm:$0xff]
    %s527 = scalar_lea.vmem [#allocation3], 18
    %v528 = vld [vmem:[%s527] ss:$2 sm:$0xff]
    %s529 = scalar_lea.vmem [#allocation3], 3
    %v530 = vld [vmem:[%s529] ss:$2 sm:$0xff]
    %s531 = scalar_lea.vmem [#allocation3], 19
    %v532 = vld [vmem:[%s531] ss:$2 sm:$0xff]
    %v533 = vld [vmem:[#allocation5] sm:$0xff]
    %v534 = vld [vmem:[#allocation5 + $0x8] sm:$0xff]
    %v535 = vld [vmem:[#allocation5 + $0x10] sm:$0xff]
    %v536 = vld [vmem:[#allocation5 + $0x18] sm:$0xff]
    %v537 = vld [vmem:[#allocation5 + $0x20] sm:$0xff]
    %v538 = vld [vmem:[#allocation5 + $0x28] sm:$0xff]
    %v539 = vld [vmem:[#allocation5 + $0x30] sm:$0xff]
    %v540 = vld [vmem:[#allocation5 + $0x38] sm:$0xff]
    %v541 = vld [vmem:[#allocation5 + $0x40] sm:$0xff]
    %v542 = vld [vmem:[#allocation5 + $0x48] sm:$0xff]
    %v543 = vld [vmem:[#allocation5 + $0x50] sm:$0xff]
    %v544 = vld [vmem:[#allocation5 + $0x58] sm:$0xff]
    %v545 = vld [vmem:[#allocation5 + $0x60] sm:$0xff]
    %v546 = vld [vmem:[#allocation5 + $0x68] sm:$0xff]
    %v547 = vld [vmem:[#allocation5 + $0x70] sm:$0xff]
    %v548 = vld [vmem:[#allocation5 + $0x78] sm:$0xff]
    %v549 = vld [vmem:[#allocation5 + $0x80] sm:$0xff]
    %v550 = vld [vmem:[#allocation5 + $0x88] sm:$0xff]
    %v551 = vld [vmem:[#allocation5 + $0x90] sm:$0xff]
    %v552 = vld [vmem:[#allocation5 + $0x98] sm:$0xff]
    %v553 = vld [vmem:[#allocation5 + $0xa0] sm:$0xff]
    %v554 = vld [vmem:[#allocation5 + $0xa8] sm:$0xff]
    %v555 = vld [vmem:[#allocation5 + $0xb0] sm:$0xff]
    %v556 = vld [vmem:[#allocation5 + $0xb8] sm:$0xff]
    %v557 = vld [vmem:[#allocation5 + $0xc0] sm:$0xff]
    %v558 = vld [vmem:[#allocation5 + $0xc8] sm:$0xff]
    %v559 = vld [vmem:[#allocation5 + $0xd0] sm:$0xff]
    %v560 = vld [vmem:[#allocation5 + $0xd8] sm:$0xff]
    %v561 = vld [vmem:[#allocation5 + $0xe0] sm:$0xff]
    %v562 = vld [vmem:[#allocation5 + $0xe8] sm:$0xff]
    %v563 = vld [vmem:[#allocation5 + $0xf0] sm:$0xff]
    %v564 = vld [vmem:[#allocation5 + $0xf8] sm:$0xff]
    %v565 = vld [vmem:[#allocation5 + $0x100] sm:$0xff]
    %v566 = vld [vmem:[#allocation5 + $0x108] sm:$0xff]
    %v567 = vld [vmem:[#allocation5 + $0x110] sm:$0xff]
    %v568 = vld [vmem:[#allocation5 + $0x118] sm:$0xff]
    %v569 = vld [vmem:[#allocation5 + $0x120] sm:$0xff]
    %v570 = vld [vmem:[#allocation5 + $0x128] sm:$0xff]
    %v571 = vld [vmem:[#allocation5 + $0x130] sm:$0xff]
    %v572 = vld [vmem:[#allocation5 + $0x138] sm:$0xff]
    %v573 = vld [vmem:[#allocation5 + $0x140] sm:$0xff]
    %v574 = vld [vmem:[#allocation5 + $0x148] sm:$0xff]
    %v575 = vld [vmem:[#allocation5 + $0x150] sm:$0xff]
    %v576 = vld [vmem:[#allocation5 + $0x158] sm:$0xff]
    %v577 = vld [vmem:[#allocation5 + $0x160] sm:$0xff]
    %v578 = vld [vmem:[#allocation5 + $0x168] sm:$0xff]
    %v579 = vld [vmem:[#allocation5 + $0x170] sm:$0xff]
    %v580 = vld [vmem:[#allocation5 + $0x178] sm:$0xff]
    %v581 = vld [vmem:[#allocation5 + $0x180] sm:$0xff]
    %v582 = vld [vmem:[#allocation5 + $0x188] sm:$0xff]
    %v583 = vld [vmem:[#allocation5 + $0x190] sm:$0xff]
    %v584 = vld [vmem:[#allocation5 + $0x198] sm:$0xff]
    %v585 = vld [vmem:[#allocation5 + $0x1a0] sm:$0xff]
    %v586 = vld [vmem:[#allocation5 + $0x1a8] sm:$0xff]
    %v587 = vld [vmem:[#allocation5 + $0x1b0] sm:$0xff]
    %v588 = vld [vmem:[#allocation5 + $0x1b8] sm:$0xff]
    %v589 = vld [vmem:[#allocation5 + $0x1c0] sm:$0xff]
    %v590 = vld [vmem:[#allocation5 + $0x1c8] sm:$0xff]
    %v591 = vld [vmem:[#allocation5 + $0x1d0] sm:$0xff]
    %v592 = vld [vmem:[#allocation5 + $0x1d8] sm:$0xff]
    %v593 = vld [vmem:[#allocation5 + $0x1e0] sm:$0xff]
    %v594 = vld [vmem:[#allocation5 + $0x1e8] sm:$0xff]
    %v595 = vld [vmem:[#allocation5 + $0x1f0] sm:$0xff]
    %v596 = vld [vmem:[#allocation5 + $0x1f8] sm:$0xff]
    %v597 = vld [vmem:[%s6] sm:$0x1]
    %v599 = vlaneseq
    %v600 = vshrl.u32 %v599, 7
    %v601 = vsub.s32 0, %v600
    %v602 = vrot.slane %v597, %v601
    %604 = vmatprep.subr.mxu0 0.0
    %605 = vmatpush1.msra.mxu0 %v533
    %606 = vmatprep.subr.mxu0 0.0
    %607 = vmatpush1.msra.mxu0 %v534
    %608 = vmatprep.subr.mxu0 0.0
    %609 = vmatpush1.msra.mxu0 %v535
    %610 = vmatprep.subr.mxu0 0.0
    %611 = vmatpush1.msra.mxu0 %v536
    %612 = vmatprep.subr.mxu0 0.0
    %613 = vmatpush1.msra.mxu0 %v537
    %614 = vmatprep.subr.mxu0 0.0
    %615 = vmatpush1.msra.mxu0 %v538
    %616 = vmatprep.subr.mxu0 0.0
    %617 = vmatpush1.msra.mxu0 %v539
    %618 = vmatprep.subr.mxu0 0.0
    %619 = vmatpush1.msra.mxu0 %v540
    %620 = vmatprep.subr.mxu0 0.0
    %621 = vmatpush1.msra.mxu0 %v541
    %622 = vmatprep.subr.mxu0 0.0
    %623 = vmatpush1.msra.mxu0 %v542
    %624 = vmatprep.subr.mxu0 0.0
    %625 = vmatpush1.msra.mxu0 %v543
    %626 = vmatprep.subr.mxu0 0.0
    %627 = vmatpush1.msra.mxu0 %v544
    %628 = vmatprep.subr.mxu0 0.0
    %629 = vmatpush1.msra.mxu0 %v545
    %630 = vmatprep.subr.mxu0 0.0
    %631 = vmatpush1.msra.mxu0 %v546
    %632 = vmatprep.subr.mxu0 0.0
    %633 = vmatpush1.msra.mxu0 %v547
    %634 = vmatprep.subr.mxu0 0.0
    %635 = vmatpush1.msra.mxu0 %v548
    %636 = vmatprep.subr.mxu0 0.0
    %637 = vmatpush1.msra.mxu0 %v549
    %638 = vmatprep.subr.mxu0 0.0
    %639 = vmatpush1.msra.mxu0 %v550
    %640 = vmatprep.subr.mxu0 0.0
    %641 = vmatpush1.msra.mxu0 %v551
    %642 = vmatprep.subr.mxu0 0.0
    %643 = vmatpush1.msra.mxu0 %v552
    %644 = vmatprep.subr.mxu0 0.0
    %645 = vmatpush1.msra.mxu0 %v553
    %646 = vmatprep.subr.mxu0 0.0
    %647 = vmatpush1.msra.mxu0 %v554
    %648 = vmatprep.subr.mxu0 0.0
    %649 = vmatpush1.msra.mxu0 %v555
    %650 = vmatprep.subr.mxu0 0.0
    %651 = vmatpush1.msra.mxu0 %v556
    %652 = vmatprep.subr.mxu0 0.0
    %653 = vmatpush1.msra.mxu0 %v557
    %654 = vmatprep.subr.mxu0 0.0
    %655 = vmatpush1.msra.mxu0 %v558
    %656 = vmatprep.subr.mxu0 0.0
    %657 = vmatpush1.msra.mxu0 %v559
    %658 = vmatprep.subr.mxu0 0.0
    %659 = vmatpush1.msra.mxu0 %v560
    %660 = vmatprep.subr.mxu0 0.0
    %661 = vmatpush1.msra.mxu0 %v561
    %662 = vmatprep.subr.mxu0 0.0
    %663 = vmatpush1.msra.mxu0 %v562
    %664 = vmatprep.subr.mxu0 0.0
    %665 = vmatpush1.msra.mxu0 %v563
    %666 = vmatprep.subr.mxu0 0.0
    %667 = vmatpush1.msra.mxu0 %v564
    %668 = vmatprep.mubr.f32.mxu0 %v522
    %669 = vmatmul.mubr.f32.gmra.mrb[0].mxu0 %v518
    %v670 = vpop.f32.mrb[0].mxu0
    %v671 = vadd.f32 %v602, %v670
    %v672 = vpop.f32.mrb[0].mxu0
    %673 = vmatprep.mubr.f32.mxu0 %v524
    %674 = vmatmul.mubr.f32.gmra.mrb[0].mxu0 %v520
    %v675 = vpop.f32.mrb[0].mxu0
    %v676 = vadd.f32 %v602, %v675
    %v677 = vpop.f32.mrb[0].mxu0
    %678 = vdwg.mxu0
    %679 = vmatprep.subr.mxu0 0.0
    %680 = vmatpush1.msra.mxu0 %v565
    %681 = vmatprep.subr.mxu0 0.0
    %682 = vmatpush1.msra.mxu0 %v566
    %683 = vmatprep.subr.mxu0 0.0
    %684 = vmatpush1.msra.mxu0 %v567
    %685 = vmatprep.subr.mxu0 0.0
    %686 = vmatpush1.msra.mxu0 %v568
    %687 = vmatprep.subr.mxu0 0.0
    %688 = vmatpush1.msra.mxu0 %v569
    %689 = vmatprep.subr.mxu0 0.0
    %690 = vmatpush1.msra.mxu0 %v570
    %691 = vmatprep.subr.mxu0 0.0
    %692 = vmatpush1.msra.mxu0 %v571
    %693 = vmatprep.subr.mxu0 0.0
    %694 = vmatpush1.msra.mxu0 %v572
    %695 = vmatprep.subr.mxu0 0.0
    %696 = vmatpush1.msra.mxu0 %v573
    %697 = vmatprep.subr.mxu0 0.0
    %698 = vmatpush1.msra.mxu0 %v574
    %699 = vmatprep.subr.mxu0 0.0
    %700 = vmatpush1.msra.mxu0 %v575
    %701 = vmatprep.subr.mxu0 0.0
    %702 = vmatpush1.msra.mxu0 %v576
    %703 = vmatprep.subr.mxu0 0.0
    %704 = vmatpush1.msra.mxu0 %v577
    %705 = vmatprep.subr.mxu0 0.0
    %706 = vmatpush1.msra.mxu0 %v578
    %707 = vmatprep.subr.mxu0 0.0
    %708 = vmatpush1.msra.mxu0 %v579
    %709 = vmatprep.subr.mxu0 0.0
    %710 = vmatpush1.msra.mxu0 %v580
    %711 = vmatprep.subr.mxu0 0.0
    %712 = vmatpush1.msra.mxu0 %v581
    %713 = vmatprep.subr.mxu0 0.0
    %714 = vmatpush1.msra.mxu0 %v582
    %715 = vmatprep.subr.mxu0 0.0
    %716 = vmatpush1.msra.mxu0 %v583
    %717 = vmatprep.subr.mxu0 0.0
    %718 = vmatpush1.msra.mxu0 %v584
    %719 = vmatprep.subr.mxu0 0.0
    %720 = vmatpush1.msra.mxu0 %v585
    %721 = vmatprep.subr.mxu0 0.0
    %722 = vmatpush1.msra.mxu0 %v586
    %723 = vmatprep.subr.mxu0 0.0
    %724 = vmatpush1.msra.mxu0 %v587
    %725 = vmatprep.subr.mxu0 0.0
    %726 = vmatpush1.msra.mxu0 %v588
    %727 = vmatprep.subr.mxu0 0.0
    %728 = vmatpush1.msra.mxu0 %v589
    %729 = vmatprep.subr.mxu0 0.0
    %730 = vmatpush1.msra.mxu0 %v590
    %731 = vmatprep.subr.mxu0 0.0
    %732 = vmatpush1.msra.mxu0 %v591
    %733 = vmatprep.subr.mxu0 0.0
    %734 = vmatpush1.msra.mxu0 %v592
    %735 = vmatprep.subr.mxu0 0.0
    %736 = vmatpush1.msra.mxu0 %v593
    %737 = vmatprep.subr.mxu0 0.0
    %738 = vmatpush1.msra.mxu0 %v594
    %739 = vmatprep.subr.mxu0 0.0
    %740 = vmatpush1.msra.mxu0 %v595
    %741 = vmatprep.subr.mxu0 0.0
    %742 = vmatpush1.msra.mxu0 %v596
    %743 = vmatprep.mubr.f32.mxu0 %v530
    %744 = vmatmul.mubr.f32.gmra.mrb[0].mxu0 %v526
    %v745 = vpop.f32.mrb[0].mxu0
    %v746 = vadd.f32 %v671, %v745
    %v747 = vpop.f32.mrb[0].mxu0
    %748 = vmatprep.mubr.f32.mxu0 %v532
    %749 = vmatmul.mubr.f32.gmra.mrb[0].mxu0 %v528
    %v750 = vpop.f32.mrb[0].mxu0
    %v751 = vadd.f32 %v676, %v750
    %v752 = vpop.f32.mrb[0].mxu0
    %753 = vdwg.mxu0
    %v754 = vmax.f32 %v746, 0.0
    %v755 = vmax.f32 %v751, 0.0
    %756 = vst [vmem:[#allocation4] sm:$0xff] %v754
    %757 = vst [vmem:[#allocation4 + $0x8] sm:$0xff] %v755
    %758 = vst [vmem:[#allocation4 + $0x10] sm:$0xff] 0.0
    %v759 = vld [vmem:[#allocation4] ss:$2 sm:$0xff]
    %s760 = scalar_lea.vmem [#allocation4], 1
    %v761 = vld [vmem:[%s760] ss:$2 sm:$0xff]
    %s762 = scalar_lea.vmem [#allocation4], 2
    %v763 = vld [vmem:[%s762] ss:$2 sm:$0xff]
    %s764 = scalar_lea.vmem [#allocation4], 3
    %v765 = vld [vmem:[%s764] ss:$2 sm:$0xff]
    %v766 = vld [vmem:[#allocation7] sm:$0xff]
    %v767 = vld [vmem:[#allocation7 + $0x8] sm:$0xff]
    %v768 = vld [vmem:[#allocation7 + $0x10] sm:$0xff]
    %v769 = vld [vmem:[#allocation7 + $0x18] sm:$0xff]
    %v770 = vld [vmem:[#allocation7 + $0x20] sm:$0xff]
    %v771 = vld [vmem:[#allocation7 + $0x28] sm:$0xff]
    %v772 = vld [vmem:[#allocation7 + $0x30] sm:$0xff]
    %v773 = vld [vmem:[#allocation7 + $0x38] sm:$0xff]
    %v774 = vld [vmem:[#allocation7 + $0x40] sm:$0xff]
    %v775 = vld [vmem:[#allocation7 + $0x48] sm:$0xff]
    %v776 = vld [vmem:[#allocation7 + $0x50] sm:$0xff]
    %v777 = vld [vmem:[#allocation7 + $0x58] sm:$0xff]
    %v778 = vld [vmem:[#allocation7 + $0x60] sm:$0xff]
    %v779 = vld [vmem:[#allocation7 + $0x68] sm:$0xff]
    %v780 = vld [vmem:[#allocation7 + $0x70] sm:$0xff]
    %v781 = vld [vmem:[#allocation7 + $0x78] sm:$0xff]
    %v782 = vld [vmem:[#allocation7 + $0x80] sm:$0xff]
    %v783 = vld [vmem:[#allocation7 + $0x88] sm:$0xff]
    %v784 = vld [vmem:[#allocation7 + $0x90] sm:$0xff]
    %v785 = vld [vmem:[#allocation7 + $0x98] sm:$0xff]
    %v786 = vld [vmem:[#allocation7 + $0xa0] sm:$0xff]
    %v787 = vld [vmem:[#allocation7 + $0xa8] sm:$0xff]
    %v788 = vld [vmem:[#allocation7 + $0xb0] sm:$0xff]
    %v789 = vld [vmem:[#allocation7 + $0xb8] sm:$0xff]
    %v790 = vld [vmem:[#allocation7 + $0xc0] sm:$0xff]
    %v791 = vld [vmem:[#allocation7 + $0xc8] sm:$0xff]
    %v792 = vld [vmem:[#allocation7 + $0xd0] sm:$0xff]
    %v793 = vld [vmem:[#allocation7 + $0xd8] sm:$0xff]
    %v794 = vld [vmem:[#allocation7 + $0xe0] sm:$0xff]
    %v795 = vld [vmem:[#allocation7 + $0xe8] sm:$0xff]
    %v796 = vld [vmem:[#allocation7 + $0xf0] sm:$0xff]
    %v797 = vld [vmem:[#allocation7 + $0xf8] sm:$0xff]
    %v798 = vld [vmem:[#allocation7 + $0x100] sm:$0xff]
    %v799 = vld [vmem:[#allocation7 + $0x108] sm:$0xff]
    %v800 = vld [vmem:[#allocation7 + $0x110] sm:$0xff]
    %v801 = vld [vmem:[#allocation7 + $0x118] sm:$0xff]
    %v802 = vld [vmem:[#allocation7 + $0x120] sm:$0xff]
    %v803 = vld [vmem:[#allocation7 + $0x128] sm:$0xff]
    %v804 = vld [vmem:[#allocation7 + $0x130] sm:$0xff]
    %v805 = vld [vmem:[#allocation7 + $0x138] sm:$0xff]
    %v806 = vld [vmem:[#allocation7 + $0x140] sm:$0xff]
    %v807 = vld [vmem:[#allocation7 + $0x148] sm:$0xff]
    %v808 = vld [vmem:[#allocation7 + $0x150] sm:$0xff]
    %v809 = vld [vmem:[#allocation7 + $0x158] sm:$0xff]
    %v810 = vld [vmem:[#allocation7 + $0x160] sm:$0xff]
    %v811 = vld [vmem:[#allocation7 + $0x168] sm:$0xff]
    %v812 = vld [vmem:[#allocation7 + $0x170] sm:$0xff]
    %v813 = vld [vmem:[#allocation7 + $0x178] sm:$0xff]
    %v814 = vld [vmem:[#allocation7 + $0x180] sm:$0xff]
    %v815 = vld [vmem:[#allocation7 + $0x188] sm:$0xff]
    %v816 = vld [vmem:[#allocation7 + $0x190] sm:$0xff]
    %v817 = vld [vmem:[#allocation7 + $0x198] sm:$0xff]
    %v818 = vld [vmem:[#allocation7 + $0x1a0] sm:$0xff]
    %v819 = vld [vmem:[#allocation7 + $0x1a8] sm:$0xff]
    %v820 = vld [vmem:[#allocation7 + $0x1b0] sm:$0xff]
    %v821 = vld [vmem:[#allocation7 + $0x1b8] sm:$0xff]
    %v822 = vld [vmem:[#allocation7 + $0x1c0] sm:$0xff]
    %v823 = vld [vmem:[#allocation7 + $0x1c8] sm:$0xff]
    %v824 = vld [vmem:[#allocation7 + $0x1d0] sm:$0xff]
    %v825 = vld [vmem:[#allocation7 + $0x1d8] sm:$0xff]
    %v826 = vld [vmem:[#allocation7 + $0x1e0] sm:$0xff]
    %v827 = vld [vmem:[#allocation7 + $0x1e8] sm:$0xff]
    %v828 = vld [vmem:[#allocation7 + $0x1f0] sm:$0xff]
    %v829 = vld [vmem:[#allocation7 + $0x1f8] sm:$0xff]
    %v830 = vld [vmem:[%s8] sm:$0x1]
    %v832 = vlaneseq
    %v833 = vshrl.u32 %v832, 7
    %v834 = vsub.s32 0, %v833
    %v835 = vrot.slane %v830, %v834
    %837 = vmatprep.subr.mxu0 0.0
    %838 = vmatpush1.msra.mxu0 %v766
    %839 = vmatprep.subr.mxu0 0.0
    %840 = vmatpush1.msra.mxu0 %v767
    %841 = vmatprep.subr.mxu0 0.0
    %842 = vmatpush1.msra.mxu0 %v768
    %843 = vmatprep.subr.mxu0 0.0
    %844 = vmatpush1.msra.mxu0 %v769
    %845 = vmatprep.subr.mxu0 0.0
    %846 = vmatpush1.msra.mxu0 %v770
    %847 = vmatprep.subr.mxu0 0.0
    %848 = vmatpush1.msra.mxu0 %v771
    %849 = vmatprep.subr.mxu0 0.0
    %850 = vmatpush1.msra.mxu0 %v772
    %851 = vmatprep.subr.mxu0 0.0
    %852 = vmatpush1.msra.mxu0 %v773
    %853 = vmatprep.subr.mxu0 0.0
    %854 = vmatpush1.msra.mxu0 %v774
    %855 = vmatprep.subr.mxu0 0.0
    %856 = vmatpush1.msra.mxu0 %v775
    %857 = vmatprep.subr.mxu0 0.0
    %858 = vmatpush1.msra.mxu0 %v776
    %859 = vmatprep.subr.mxu0 0.0
    %860 = vmatpush1.msra.mxu0 %v777
    %861 = vmatprep.subr.mxu0 0.0
    %862 = vmatpush1.msra.mxu0 %v778
    %863 = vmatprep.subr.mxu0 0.0
    %864 = vmatpush1.msra.mxu0 %v779
    %865 = vmatprep.subr.mxu0 0.0
    %866 = vmatpush1.msra.mxu0 %v780
    %867 = vmatprep.subr.mxu0 0.0
    %868 = vmatpush1.msra.mxu0 %v781
    %869 = vmatprep.subr.mxu0 0.0
    %870 = vmatpush1.msra.mxu0 %v782
    %871 = vmatprep.subr.mxu0 0.0
    %872 = vmatpush1.msra.mxu0 %v783
    %873 = vmatprep.subr.mxu0 0.0
    %874 = vmatpush1.msra.mxu0 %v784
    %875 = vmatprep.subr.mxu0 0.0
    %876 = vmatpush1.msra.mxu0 %v785
    %877 = vmatprep.subr.mxu0 0.0
    %878 = vmatpush1.msra.mxu0 %v786
    %879 = vmatprep.subr.mxu0 0.0
    %880 = vmatpush1.msra.mxu0 %v787
    %881 = vmatprep.subr.mxu0 0.0
    %882 = vmatpush1.msra.mxu0 %v788
    %883 = vmatprep.subr.mxu0 0.0
    %884 = vmatpush1.msra.mxu0 %v789
    %885 = vmatprep.subr.mxu0 0.0
    %886 = vmatpush1.msra.mxu0 %v790
    %887 = vmatprep.subr.mxu0 0.0
    %888 = vmatpush1.msra.mxu0 %v791
    %889 = vmatprep.subr.mxu0 0.0
    %890 = vmatpush1.msra.mxu0 %v792
    %891 = vmatprep.subr.mxu0 0.0
    %892 = vmatpush1.msra.mxu0 %v793
    %893 = vmatprep.subr.mxu0 0.0
    %894 = vmatpush1.msra.mxu0 %v794
    %895 = vmatprep.subr.mxu0 0.0
    %896 = vmatpush1.msra.mxu0 %v795
    %897 = vmatprep.subr.mxu0 0.0
    %898 = vmatpush1.msra.mxu0 %v796
    %899 = vmatprep.subr.mxu0 0.0
    %900 = vmatpush1.msra.mxu0 %v797
    %901 = vmatprep.mubr.f32.mxu0 %v761
    %902 = vmatmul.mubr.f32.gmra.mrb[0].mxu0 %v759
    %v903 = vpop.f32.mrb[0].mxu0
    %v904 = vadd.f32 %v835, %v903
    %v905 = vpop.f32.mrb[0].mxu0
    %906 = vdwg.mxu0
    %907 = vmatprep.subr.mxu0 0.0
    %908 = vmatpush1.msra.mxu0 %v798
    %909 = vmatprep.subr.mxu0 0.0
    %910 = vmatpush1.msra.mxu0 %v799
    %911 = vmatprep.subr.mxu0 0.0
    %912 = vmatpush1.msra.mxu0 %v800
    %913 = vmatprep.subr.mxu0 0.0
    %914 = vmatpush1.msra.mxu0 %v801
    %915 = vmatprep.subr.mxu0 0.0
    %916 = vmatpush1.msra.mxu0 %v802
    %917 = vmatprep.subr.mxu0 0.0
    %918 = vmatpush1.msra.mxu0 %v803
    %919 = vmatprep.subr.mxu0 0.0
    %920 = vmatpush1.msra.mxu0 %v804
    %921 = vmatprep.subr.mxu0 0.0
    %922 = vmatpush1.msra.mxu0 %v805
    %923 = vmatprep.subr.mxu0 0.0
    %924 = vmatpush1.msra.mxu0 %v806
    %925 = vmatprep.subr.mxu0 0.0
    %926 = vmatpush1.msra.mxu0 %v807
    %927 = vmatprep.subr.mxu0 0.0
    %928 = vmatpush1.msra.mxu0 %v808
    %929 = vmatprep.subr.mxu0 0.0
    %930 = vmatpush1.msra.mxu0 %v809
    %931 = vmatprep.subr.mxu0 0.0
    %932 = vmatpush1.msra.mxu0 %v810
    %933 = vmatprep.subr.mxu0 0.0
    %934 = vmatpush1.msra.mxu0 %v811
    %935 = vmatprep.subr.mxu0 0.0
    %936 = vmatpush1.msra.mxu0 %v812
    %937 = vmatprep.subr.mxu0 0.0
    %938 = vmatpush1.msra.mxu0 %v813
    %939 = vmatprep.subr.mxu0 0.0
    %940 = vmatpush1.msra.mxu0 %v814
    %941 = vmatprep.subr.mxu0 0.0
    %942 = vmatpush1.msra.mxu0 %v815
    %943 = vmatprep.subr.mxu0 0.0
    %944 = vmatpush1.msra.mxu0 %v816
    %945 = vmatprep.subr.mxu0 0.0
    %946 = vmatpush1.msra.mxu0 %v817
    %947 = vmatprep.subr.mxu0 0.0
    %948 = vmatpush1.msra.mxu0 %v818
    %949 = vmatprep.subr.mxu0 0.0
    %950 = vmatpush1.msra.mxu0 %v819
    %951 = vmatprep.subr.mxu0 0.0
    %952 = vmatpush1.msra.mxu0 %v820
    %953 = vmatprep.subr.mxu0 0.0
    %954 = vmatpush1.msra.mxu0 %v821
    %955 = vmatprep.subr.mxu0 0.0
    %956 = vmatpush1.msra.mxu0 %v822
    %957 = vmatprep.subr.mxu0 0.0
    %958 = vmatpush1.msra.mxu0 %v823
    %959 = vmatprep.subr.mxu0 0.0
    %960 = vmatpush1.msra.mxu0 %v824
    %961 = vmatprep.subr.mxu0 0.0
    %962 = vmatpush1.msra.mxu0 %v825
    %963 = vmatprep.subr.mxu0 0.0
    %964 = vmatpush1.msra.mxu0 %v826
    %965 = vmatprep.subr.mxu0 0.0
    %966 = vmatpush1.msra.mxu0 %v827
    %967 = vmatprep.subr.mxu0 0.0
    %968 = vmatpush1.msra.mxu0 %v828
    %969 = vmatprep.subr.mxu0 0.0
    %970 = vmatpush1.msra.mxu0 %v829
    %971 = vmatprep.mubr.f32.mxu0 %v765
    %972 = vmatmul.mubr.f32.gmra.mrb[0].mxu0 %v763
    %v973 = vpop.f32.mrb[0].mxu0
    %v974 = vadd.f32 %v904, %v973
    %v975 = vpop.f32.mrb[0].mxu0
    %976 = vdwg.mxu0
    %v977 = vmax.f32 %v974, 0.0
    %978 = vst [vmem:[%s9] sm:$0xff] %v977
    // Predicated region
    $region46: #{_lambda_.1} parent=1 // pred_check
      _
    $region47: #{_lambda_.1} parent=1 // pred_check_branch
      %980 = sbr.rel (0) target = $region49
    $region48: #{_lambda_.1} parent=1 // pred_region
      _
    $region49: #{_lambda_.1} parent=1 // pred_fallthru
      _
    // Predicated region
    $region50: #{_lambda_.1} parent=1 // pred_check
      _
    $region51: #{_lambda_.1} parent=1 // pred_check_branch
      %982 = sbr.rel (0) target = $region53
    $region52: #{_lambda_.1} parent=1 // pred_region
      _
    $region53: #{_lambda_.1} parent=1 // pred_fallthru
      _
    %983 = vsyncpa [#allocation6], 1
    %984 = vsyncpa [#allocation8], 1

</llo_original>
